<compile_context>
chip_gen: v7x
topology: tpu7x:2x2x1
jax: 0.10.0
libtpu: 0.0.40
codegen_flags: <defaults>
</compile_context>

<pallas_src>
import functools

import jax
import jax.numpy as jnp
from jax.experimental import pallas as pl
from jax.experimental.pallas import tpu as pltpu

# ---- deterministic "cfg" ----------------------------------------------------
MEAN = 0.5       # cfg.DATASET.MEAN
STD = 2.0        # cfg.DATASET.STD
POINTS = 16      # cfg.DATASET.POINTS (sequence length T)


# ---- Pallas kernels ----------------------------------------------------------
def _jitter_kernel(x_ref, *refs, num_views):
    """Fused random_jitter on a lane-dense (TB, C*T) block.

    PyTorch chain  (((x*std + mean) + n*sigma) - mean) / std  folds exactly to
    x + n * (sigma/std).  scale_ref holds sigma/std per sample (one row per
    batch element).  Noise arrives as a lane-dense HBM input (generated in the
    wrapper with jax.random.normal).  Emits `num_views` independent jittered
    views from one read of x.
    """
    noise_refs = refs[:num_views]
    scale_refs = refs[num_views:2 * num_views]
    out_refs = refs[2 * num_views:]

    x = x_ref[...].astype(jnp.float32)              # read x once, fp32 math
    for n_ref, s_ref, o_ref in zip(noise_refs, scale_refs, out_refs):
        noise = n_ref[...].astype(jnp.float32)
        # s_ref is (TB, 1) -> sublane broadcast against (TB, C*T)
        o_ref[...] = (x + noise * s_ref[...]).astype(o_ref.dtype)


def _clr_kernel(x_ref, o_ref):
    """Compose(normal_augs_wo_spec) on a (TB, C, T) block, original layout.

    crop(resize=POINTS): identity when T == POINTS (input already at POINTS).
    TimeReverse(random=False): reverse along time == last axis in (B, C, T).
    SignFlip(random=False): negate.
    """
    # TODO(synk): TimeShift(random=False) semantics unknown; treated as a zero shift.
    o_ref[...] = (-jnp.flip(x_ref[...], axis=-1)).astype(o_ref.dtype)


# ---- tiling helper ------------------------------------------------------------
def _pick_batch_tile(B, row_bytes, target_bytes=2 << 20):
    """Rows (batch samples) per block: ~2 MiB tiles (safe under the 32 MiB
    scoped-VMEM default on all generations, incl. v7x's 64 MiB physical VMEM,
    with double-buffered inputs + outputs), while respecting the (8, 128)
    block-shape rule (block dim must be a multiple of 8 or the full extent)
    and dividing B so no ragged blocks are produced."""
    if B * row_bytes <= target_bytes:
        return B
    limit = max(1, target_bytes // row_bytes)
    for tb in range(min(B, limit), 0, -1):
        if B % tb == 0 and tb % 8 == 0:
            return tb
    return B  # fallback: whole batch in one block


# ---- pallas_call wrappers ------------------------------------------------------
def jitter_pallas(x_bct, noises_b, scales_b):
    """x_bct: (B, C, T); noises_b: list of (B, C, T) N(0,1) arrays;
    scales_b: list of per-sample (B,) arrays (= sigma/std).
    Returns one (B, C, T) jittered view per (noise, scale) pair."""
    B, C, T = x_bct.shape
    n = len(scales_b)
    assert len(noises_b) == n
    row = C * T

    # Lane-dense elementwise view: one sample per row, C*T lanes per row.
    x2 = x_bct.reshape(B, row)
    noises2 = [nz.astype(jnp.float32).reshape(B, row) for nz in noises_b]
    scales2 = [s.astype(jnp.float32).reshape(B, 1) for s in scales_b]

    # Per block: (1 + n) data inputs + n outputs, all double-buffered.
    tb = _pick_batch_tile(B, row * 4 * (1 + 2 * n))
    grid = (pl.cdiv(B, tb),)

    data_spec = pl.BlockSpec((tb, row), lambda i: (i, 0))
    scale_spec = pl.BlockSpec((tb, 1), lambda i: (i, 0))

    kern = functools.partial(_jitter_kernel, num_views=n)
    outs = pl.pallas_call(
        kern,
        out_shape=tuple(jax.ShapeDtypeStruct((B, row), x_bct.dtype)
                        for _ in range(n)),
        grid=grid,
        in_specs=[data_spec] + [data_spec] * n + [scale_spec] * n,
        out_specs=tuple(pl.BlockSpec((tb, row), lambda i: (i, 0))
                        for _ in range(n)),
        compiler_params=pltpu.CompilerParams(
            dimension_semantics=("parallel",)),   # independent blocks -> megacore
    )(x2, *noises2, *scales2)
    return [o.reshape(B, C, T) for o in outs]


def clr_pallas(x_bct):
    B, C, T = x_bct.shape
    assert T == POINTS, "crop(resize=POINTS) assumed identity: requires T == POINTS"
    tb = _pick_batch_tile(B, C * T * x_bct.dtype.itemsize)
    grid = (pl.cdiv(B, tb),)
    return pl.pallas_call(
        _clr_kernel,
        out_shape=jax.ShapeDtypeStruct((B, C, T), x_bct.dtype),
        grid=grid,
        in_specs=[pl.BlockSpec((tb, C, T), lambda i: (i, 0, 0))],
        out_specs=pl.BlockSpec((tb, C, T), lambda i: (i, 0, 0)),
        compiler_params=pltpu.CompilerParams(
            dimension_semantics=("parallel",)),
    )(x_bct)


# ---- AutoAUG module ------------------------------------------------------------
class AutoAUG:
    def __init__(self, mean=MEAN, std=STD, points=POINTS):
        self.mean = float(mean)
        self.std = float(std)
        self.points = int(points)

    def _jitter_views(self, x_bct, key, num_views):
        """jitter(sigma=std*0.2, random_sigma=True) on de-normalized data, with
        the de/re-normalization folded into a single per-sample scale sigma/std.
        Returns (list of views, list of per-sample sigma labels)."""
        max_sigma = self.std * 0.2
        B, C, T = x_bct.shape
        keys = jax.random.split(key, 2 * num_views)
        k_sig, k_noise = keys[:num_views], keys[num_views:]
        # per-sample sigma in [0, max_sigma) -> returned as labels
        sigmas = [jax.random.uniform(k, (B,), jnp.float32) * max_sigma
                  for k in k_sig]
        scales = [s / self.std for s in sigmas]
        noises = [jax.random.normal(k, (B, C, T), jnp.float32)
                  for k in k_noise]
        outs = jitter_pallas(x_bct, noises, scales)
        return outs, sigmas

    def __call__(self, x, step=None, key=None):
        # PyTorch transposes to (B, T, C) up front and back at the end; every
        # implemented aug commutes with that transpose (jitter is elementwise,
        # TimeReverse flips the time axis, SignFlip negates), so we work in the
        # original (B, C, T) layout and skip both HBM transpose passes.
        if step == "clr":
            # Compose(normal_augs_wo_spec) is fully deterministic (random=False),
            # so both views are bit-identical: compute once, alias twice.
            out = clr_pallas(x)
            return out, out
        elif step == "rec":
            (aug1, aug2), _ = self._jitter_views(x, key, 2)   # one fused kernel
            return aug1, aug2
        elif step == "pred":
            (spec_x,), (labels,) = self._jitter_views(x, key, 1)
            return spec_x, labels
        else:
            # x.transpose(1, 2).transpose(1, 2) == x
            return x


# ---- demo --------------------------------------------------------------------
if __name__ == "__main__":
    key = jax.random.PRNGKey(0)
    k_x, k_rec, k_pred = jax.random.split(key, 3)

    B, C, T = 2, 8, POINTS
    x = jax.random.normal(k_x, (B, C, T), jnp.float32)

    model = AutoAUG()

    # default path: identity
    y = model(x, step=None)
    y = jax.block_until_ready(y)
    assert y.shape == (B, C, T)
    assert jnp.allclose(y, x)

    # 'rec' path: two jittered views from a single fused kernel
    a1, a2 = model(x, step="rec", key=k_rec)
    a1, a2 = jax.block_until_ready((a1, a2))
    assert a1.shape == (B, C, T) and a2.shape == (B, C, T)
    assert bool(jnp.all(jnp.isfinite(a1))) and bool(jnp.all(jnp.isfinite(a2)))
    assert not bool(jnp.allclose(a1, a2))          # independent noise draws

    # 'pred' path: jittered view + per-sample sigma labels
    spec_x, labels = model(x, step="pred", key=k_pred)
    spec_x, labels = jax.block_until_ready((spec_x, labels))
    assert spec_x.shape == (B, C, T) and labels.shape == (B,)
    assert bool(jnp.all(labels >= 0.0)) and bool(jnp.all(labels <= STD * 0.2))

    # 'clr' path: deterministic time-reverse + sign-flip (computed once)
    c1, c2 = model(x, step="clr")
    c1, c2 = jax.block_until_ready((c1, c2))
    assert c1.shape == (B, C, T)
    assert jnp.allclose(c1, -x[:, :, ::-1])
    assert jnp.allclose(c1, c2)

    print("KERNEL_OK")
</pallas_src>

<mosaic_0001>
module attributes {stable_mosaic.version = 11 : i64} {
  func.func @_jitter_kernel(%arg0: i32, %arg1: memref<2x128xf32, #tpu.memory_space<vmem>>, %arg2: memref<2x128xf32, #tpu.memory_space<vmem>>, %arg3: memref<2x128xf32, #tpu.memory_space<vmem>>, %arg4: memref<2x1xf32, #tpu.memory_space<vmem>>, %arg5: memref<2x1xf32, #tpu.memory_space<vmem>>, %arg6: memref<2x128xf32, #tpu.memory_space<vmem>>, %arg7: memref<2x128xf32, #tpu.memory_space<vmem>>) attributes {dimension_semantics = [#tpu.dimension_semantics<parallel>], iteration_bounds = array<i64: 1>, scalar_prefetch = 0 : i64, scratch_operands = 0 : i64, tpu.core_type = #tpu.core_type<tc>, window_params = [{transform_indices = @transform_0, window_bounds = array<i64: 2, 128>}, {transform_indices = @transform_1, window_bounds = array<i64: 2, 128>}, {transform_indices = @transform_2, window_bounds = array<i64: 2, 128>}, {transform_indices = @transform_3, window_bounds = array<i64: 2, 1>}, {transform_indices = @transform_4, window_bounds = array<i64: 2, 1>}, {transform_indices = @transform_5, window_bounds = array<i64: 2, 128>}, {transform_indices = @transform_6, window_bounds = array<i64: 2, 128>}]} {
    %c0 = arith.constant 0 : index
    %c0_0 = arith.constant 0 : index
    %0 = vector.load %arg1[%c0, %c0_0] : memref<2x128xf32, #tpu.memory_space<vmem>>, vector<2x128xf32>
    %c0_1 = arith.constant 0 : index
    %c0_2 = arith.constant 0 : index
    %1 = vector.load %arg2[%c0_1, %c0_2] : memref<2x128xf32, #tpu.memory_space<vmem>>, vector<2x128xf32>
    %c0_3 = arith.constant 0 : index
    %c0_4 = arith.constant 0 : index
    %2 = vector.load %arg4[%c0_3, %c0_4] : memref<2x1xf32, #tpu.memory_space<vmem>>, vector<2x1xf32>
    %3 = vector.broadcast %2 : vector<2x1xf32> to vector<2x128xf32>
    %4 = arith.mulf %1, %3 : vector<2x128xf32>
    %5 = arith.addf %0, %4 : vector<2x128xf32>
    %c0_5 = arith.constant 0 : index
    %c0_6 = arith.constant 0 : index
    %6 = vector.load %arg6[%c0_5, %c0_6] : memref<2x128xf32, #tpu.memory_space<vmem>>, vector<2x128xf32>
    tpu.vector_store %arg6[%c0_5, %c0_6], %5 {strides = array<i32>} : memref<2x128xf32, #tpu.memory_space<vmem>>, vector<2x128xf32>,
    %c0_7 = arith.constant 0 : index
    %c0_8 = arith.constant 0 : index
    %7 = vector.load %arg3[%c0_7, %c0_8] : memref<2x128xf32, #tpu.memory_space<vmem>>, vector<2x128xf32>
    %c0_9 = arith.constant 0 : index
    %c0_10 = arith.constant 0 : index
    %8 = vector.load %arg5[%c0_9, %c0_10] : memref<2x1xf32, #tpu.memory_space<vmem>>, vector<2x1xf32>
    %9 = vector.broadcast %8 : vector<2x1xf32> to vector<2x128xf32>
    %10 = arith.mulf %7, %9 : vector<2x128xf32>
    %11 = arith.addf %0, %10 : vector<2x128xf32>
    %c0_11 = arith.constant 0 : index
    %c0_12 = arith.constant 0 : index
    %12 = vector.load %arg7[%c0_11, %c0_12] : memref<2x128xf32, #tpu.memory_space<vmem>>, vector<2x128xf32>
    tpu.vector_store %arg7[%c0_11, %c0_12], %11 {strides = array<i32>} : memref<2x128xf32, #tpu.memory_space<vmem>>, vector<2x128xf32>,
    return
  }
  func.func @transform_0(%arg0: i32) -> (i32, i32) {
    %c0_i32 = arith.constant 0 : i32
    %c0_i32_0 = arith.constant 0 : i32
    return %arg0, %c0_i32 : i32, i32
  }
  func.func @transform_1(%arg0: i32) -> (i32, i32) {
    %c0_i32 = arith.constant 0 : i32
    %c0_i32_0 = arith.constant 0 : i32
    return %arg0, %c0_i32 : i32, i32
  }
  func.func @transform_2(%arg0: i32) -> (i32, i32) {
    %c0_i32 = arith.constant 0 : i32
    %c0_i32_0 = arith.constant 0 : i32
    return %arg0, %c0_i32 : i32, i32
  }
  func.func @transform_3(%arg0: i32) -> (i32, i32) {
    %c0_i32 = arith.constant 0 : i32
    %c0_i32_0 = arith.constant 0 : i32
    return %arg0, %c0_i32 : i32, i32
  }
  func.func @transform_4(%arg0: i32) -> (i32, i32) {
    %c0_i32 = arith.constant 0 : i32
    %c0_i32_0 = arith.constant 0 : i32
    return %arg0, %c0_i32 : i32, i32
  }
  func.func @transform_5(%arg0: i32) -> (i32, i32) {
    %c0_i32 = arith.constant 0 : i32
    %c0_i32_0 = arith.constant 0 : i32
    return %arg0, %c0_i32 : i32, i32
  }
  func.func @transform_6(%arg0: i32) -> (i32, i32) {
    %c0_i32 = arith.constant 0 : i32
    %c0_i32_0 = arith.constant 0 : i32
    return %arg0, %c0_i32 : i32, i32
  }
}

</mosaic_0001>

<llo_original>
// kernel: tpu_custom_call.1
$region0: #{tpu_custom_call.1}
  #allocation0 [shape = 'u32[]', space=smem, size = 0x4, offset = 0x4, fixed_abs, tag = 'smem constant byte address 0x4 - core index']
  #allocation1 [shape = 'u32[144,128]{1,0:T(1,128)}', space=vmem, size = 0x12000, scoped, tag = 'internal scratch']
  %s0 = inlined_call_operand.vmem [shape: f32[2,128], index: 0, kind: input, shape index: {}]
  %s1 = inlined_call_operand.vmem [shape: f32[2,128], index: 1, kind: input, shape index: {}]
  %s2 = inlined_call_operand.vmem [shape: f32[2,128], index: 2, kind: input, shape index: {}]
  %s3 = inlined_call_operand.vmem [shape: f32[2,1], index: 3, kind: input, shape index: {}]
  %s4 = inlined_call_operand.vmem [shape: f32[2,1], index: 4, kind: input, shape index: {}]
  %s5 = inlined_call_operand.hbm [shape: f32[2,128], index: 5, kind: output, shape index: {0}]
  %s6 = inlined_call_operand.hbm [shape: f32[2,128], index: 6, kind: output, shape index: {1}]
  %7 = xla_tuple %s5, %s6
  %s8 = sld [smem:[#allocation0]]
  $region38: #{tpu_custom_call.1} parent=0
    _
  %s10 = ssub.s32 1, %s8
  %s11 = scalar_select 0, %s10, %s8
  $region1: #{tpu_custom_call.1} parent=0
    #allocation2 [shape = 'u8[1024]{0}', space=vmem, size = 0x400, scoped, tag = 'output window, operand 0, single buffered']
    #allocation3 [shape = 's32[1]{0}', space=sflag, size = 0x4, scoped, tag = 'scoped memory for tpu_custom_call.1']
    #allocation4 [shape = 'u8[1024]{0}', space=vmem, size = 0x400, scoped, tag = 'output window, operand 1, single buffered']
    #allocation5 [shape = 's32[1]{0}', space=sflag, size = 0x4, scoped, tag = 'scoped memory for tpu_custom_call.1']
    %12 = vsyncpa [#allocation3], 0
    %13 = vsyncpa [#allocation5], 0
    // Predicated region
    $region2: #{tpu_custom_call.1} parent=1 // pred_check
      _
    $region3: #{tpu_custom_call.1} parent=1 // pred_check_branch
      %15 = sbr.rel (0) target = $region5
    $region4: #{tpu_custom_call.1} parent=1 // pred_region
      _
    $region5: #{tpu_custom_call.1} parent=1 // pred_fallthru
      _
    // Predicated region
    $region6: #{tpu_custom_call.1} parent=1 // pred_check
      _
    $region7: #{tpu_custom_call.1} parent=1 // pred_check_branch
      %17 = sbr.rel (0) target = $region9
    $region8: #{tpu_custom_call.1} parent=1 // pred_region
      _
    $region9: #{tpu_custom_call.1} parent=1 // pred_fallthru
      _
    // Predicated region
    $region10: #{tpu_custom_call.1} parent=1 // pred_check
      _
    $region11: #{tpu_custom_call.1} parent=1 // pred_check_branch
      %19 = sbr.rel (0) target = $region13
    $region12: #{tpu_custom_call.1} parent=1 // pred_region
      _
    $region13: #{tpu_custom_call.1} parent=1 // pred_fallthru
      _
    // Predicated region
    $region14: #{tpu_custom_call.1} parent=1 // pred_check
      _
    $region15: #{tpu_custom_call.1} parent=1 // pred_check_branch
      %21 = sbr.rel (0) target = $region17
    $region16: #{tpu_custom_call.1} parent=1 // pred_region
      _
    $region17: #{tpu_custom_call.1} parent=1 // pred_fallthru
      _
    // Predicated region
    $region18: #{tpu_custom_call.1} parent=1 // pred_check
      _
    $region19: #{tpu_custom_call.1} parent=1 // pred_check_branch
      %23 = sbr.rel (0) target = $region21
    $region20: #{tpu_custom_call.1} parent=1 // pred_region
      _
    $region21: #{tpu_custom_call.1} parent=1 // pred_fallthru
      _
    %v24 = vld [vmem:[%s0] sm:$0x3]
    %v25 = vld [vmem:[%s1] sm:$0x3]
    %v26 = vld [vmem:[%s3] sm:$0x3]
    %28 = vset.pattern.permute.xlu0 0
    %29 = vperm.xlu0 %28, %v26
    %v30 = vpop.permute.xlu0 %29
    %v32 = vmul.f32 %v25, %v30
    %v33 = vadd.f32 %v24, %v32
    %34 = vst [vmem:[#allocation2] sm:$0x3] %v33
    %v35 = vld [vmem:[%s2] sm:$0x3]
    %v36 = vld [vmem:[%s4] sm:$0x3]
    %38 = vset.pattern.permute.xlu0 0
    %39 = vperm.xlu0 %38, %v36
    %v40 = vpop.permute.xlu0 %39
    %v42 = vmul.f32 %v35, %v40
    %v43 = vadd.f32 %v24, %v42
    %44 = vst [vmem:[#allocation4] sm:$0x3] %v43
    // Predicated region
    $region22: #{tpu_custom_call.1} parent=1 // pred_check
      _
    $region23: #{tpu_custom_call.1} parent=1 // pred_check_branch
      %46 = sbr.rel (0) target = $region25
    $region24: #{tpu_custom_call.1} parent=1 // pred_region
      %s48 = ssub.s32 32, 32
      %49 = vsyncadd [#allocation3], %s48
      %s51 = sshll.u32 [#allocation2], 4
      %s52 = int_to_ptr.vmem [resolvable:$true] %s51
      %54 = dma.vmem_to_hbm [thread:$0]  %s52, 32, %s5, [#allocation3]
    $region25: #{tpu_custom_call.1} parent=1 // pred_fallthru
      _
    // Predicated region
    $region26: #{tpu_custom_call.1} parent=1 // pred_check
      _
    $region27: #{tpu_custom_call.1} parent=1 // pred_check_branch
      %56 = sbr.rel (0) target = $region29
    $region28: #{tpu_custom_call.1} parent=1 // pred_region
      %s58 = ssub.s32 32, 32
      %59 = vsyncadd [#allocation5], %s58
      %s61 = sshll.u32 [#allocation4], 4
      %s62 = int_to_ptr.vmem [resolvable:$true] %s61
      %64 = dma.vmem_to_hbm [thread:$0]  %s62, 32, %s6, [#allocation5]
    $region29: #{tpu_custom_call.1} parent=1 // pred_fallthru
      _
    // Predicated region
    $region30: #{tpu_custom_call.1} parent=1 // pred_check
      _
    $region31: #{tpu_custom_call.1} parent=1 // pred_check_branch
      %66 = sbr.rel (0) target = $region33
    $region32: #{tpu_custom_call.1} parent=1 // pred_region
      %67 = dma.done [#allocation3], 32
    $region33: #{tpu_custom_call.1} parent=1 // pred_fallthru
      _
    // Predicated region
    $region34: #{tpu_custom_call.1} parent=1 // pred_check
      _
    $region35: #{tpu_custom_call.1} parent=1 // pred_check_branch
      %69 = sbr.rel (0) target = $region37
    $region36: #{tpu_custom_call.1} parent=1 // pred_region
      %70 = dma.done [#allocation5], 32
    $region37: #{tpu_custom_call.1} parent=1 // pred_fallthru
      _
    %71 = vsyncpa [#allocation3], 1
    %72 = vsyncpa [#allocation5], 1

</llo_original>
